<compile_context>
chip_gen: v7x
topology: tpu7x:2x2x1
jax: 0.10.0
libtpu: 0.0.40
codegen_flags: <defaults>
</compile_context>

<pallas_src>
import functools

import jax
import jax.numpy as jnp
from jax.experimental import pallas as pl
from jax.experimental.pallas import tpu as pltpu


def _round_up(x, m):
    return (x + m - 1) // m * m


def _pick_batch_tile(bp, n, vmem_block_budget):
    """Largest multiple-of-8 batch tile that divides bp and fits the VMEM budget."""
    n_lanes = _round_up(n, 128)
    # Double-buffered f32 VMEM per batch row: 4 input coordinate planes plus two
    # 3-row point outputs (sublane-padded to 8 rows in VMEM).
    bytes_per_row = 2 * (4 + 8 + 8) * n_lanes * 4
    cap = max(8, (vmem_block_budget // bytes_per_row) // 8 * 8)
    tb = 8
    cand = min(cap, bp)
    while cand >= 8:
        if bp % cand == 0:
            tb = cand
            break
        cand -= 8
    # v7x has two TensorCores: keep >= 2 parallel grid steps when batch allows.
    if bp // tb < 2 and bp >= 16 and (bp // 2) % 8 == 0:
        tb = bp // 2
    return tb


def _norm_expand_kernel(x_ref, pts1_ref, pts2_ref, t_ref, *, n_pts):
    # x_ref block: (4, TB, N) -- batch on sublanes, points on lanes.
    x1 = x_ref[0]
    y1 = x_ref[1]
    x2 = x_ref[2]
    y2 = x_ref[3]
    inv_n = jnp.float32(1.0 / n_pts)

    def stats(xx, yy):
        cx = jnp.sum(xx, axis=1, keepdims=True) * inv_n          # (TB, 1)
        cy = jnp.sum(yy, axis=1, keepdims=True) * inv_n
        dx = xx - cx
        dy = yy - cy
        meandist = jnp.sum(jnp.sqrt(dx * dx + dy * dy), axis=1, keepdims=True) * inv_n
        scale = 1.0 / meandist                                   # matches torch: 1/meandist
        return scale, -cx * scale, -cy * scale

    s1, tx1, ty1 = stats(x1, y1)
    s2, tx2, ty2 = stats(x2, y2)

    ones_row = jnp.ones_like(x1)
    # pts_out = T @ [x; y; 1]: row0 = s*x + tx, row1 = s*y + ty, row2 = 1.
    pts1_ref[:, 0, :] = s1 * x1 + tx1
    pts1_ref[:, 1, :] = s1 * y1 + ty1
    pts1_ref[:, 2, :] = ones_row
    pts2_ref[:, 0, :] = s2 * x2 + tx2
    pts2_ref[:, 1, :] = s2 * y2 + ty2
    pts2_ref[:, 2, :] = ones_row

    # Lane-packed normalisation parameters: [s1, tx1, ty1, s2, tx2, ty2].
    t_ref[:, 0:1] = s1
    t_ref[:, 1:2] = tx1
    t_ref[:, 2:3] = ty1
    t_ref[:, 3:4] = s2
    t_ref[:, 4:5] = tx2
    t_ref[:, 5:6] = ty2


def normalize_and_expand(pts, *, vmem_block_budget=8 * 1024 * 1024):
    """pts: (B, N, 4). Returns (pts1, pts2, T1, T2) like the PyTorch module."""
    B, N, four = pts.shape
    assert four == 4

    bp = _round_up(B, 8)
    tb = _pick_batch_tile(bp, N, vmem_block_budget)
    grid = (bp // tb,)

    x = pts.astype(jnp.float32)
    # Single fused XLA copy: cast + transpose to coordinate-major + batch pad.
    xt = jnp.transpose(x, (2, 0, 1))                             # (4, B, N)
    if bp != B:
        xt = jnp.pad(xt, ((0, 0), (0, bp - B), (0, 0)))          # zero rows -> harmless

    kernel = functools.partial(_norm_expand_kernel, n_pts=N)
    out_shape = (
        jax.ShapeDtypeStruct((bp, 3, N), jnp.float32),           # pts1
        jax.ShapeDtypeStruct((bp, 3, N), jnp.float32),           # pts2
        jax.ShapeDtypeStruct((bp, 6), jnp.float32),              # packed T params
    )
    grid_spec = pltpu.PrefetchScalarGridSpec(
        num_scalar_prefetch=0,
        grid=grid,
        in_specs=[pl.BlockSpec((4, tb, N), lambda i: (0, i, 0))],
        out_specs=[
            pl.BlockSpec((tb, 3, N), lambda i: (i, 0, 0)),
            pl.BlockSpec((tb, 3, N), lambda i: (i, 0, 0)),
            pl.BlockSpec((tb, 6), lambda i: (i, 0)),
        ],
    )
    pts1, pts2, tpar = pl.pallas_call(
        kernel,
        out_shape=out_shape,
        grid_spec=grid_spec,
        compiler_params=pltpu.CompilerParams(
            dimension_semantics=("parallel",),
            vmem_limit_bytes=32 * 1024 * 1024,
        ),
    )(xt)

    pts1 = pts1[:B]
    pts2 = pts2[:B]
    tpar = tpar[:B]

    # Negligible XLA glue: assemble the (B, 3, 3) T matrices from 6 scalars/row.
    def build_T(s, tx, ty):
        T = jnp.zeros((B, 3, 3), jnp.float32)
        T = T.at[:, 0, 0].set(s)
        T = T.at[:, 1, 1].set(s)
        T = T.at[:, 2, 2].set(1.0)
        T = T.at[:, 0, 2].set(tx)
        T = T.at[:, 1, 2].set(ty)
        return T

    T1 = build_T(tpar[:, 0], tpar[:, 1], tpar[:, 2])
    T2 = build_T(tpar[:, 3], tpar[:, 4], tpar[:, 5])
    return pts1, pts2, T1, T2


def _reference(pts):
    """Pure-JAX mirror of the PyTorch module."""
    def norm(xy):
        B, N, _ = xy.shape
        ones = jnp.ones((B, N, 1), xy.dtype)
        p = jnp.concatenate([xy, ones], axis=2)                  # (B, N, 3)
        c = jnp.mean(p, axis=1)                                  # (B, 3)
        newp = p - c[:, None, :]
        meandist = jnp.mean(jnp.sqrt(jnp.sum(newp[:, :, :2] ** 2, axis=2)), axis=1)
        scale = 1.0 / meandist
        T = jnp.zeros((B, 3, 3), xy.dtype)
        T = T.at[:, 0, 0].set(scale)
        T = T.at[:, 1, 1].set(scale)
        T = T.at[:, 2, 2].set(1.0)
        T = T.at[:, 0, 2].set(-c[:, 0] * scale)
        T = T.at[:, 1, 2].set(-c[:, 1] * scale)
        out = jnp.einsum("bij,bnj->bin", T, p)                   # (B, 3, N)
        return out, T

    p1, t1 = norm(pts[:, :, :2])
    p2, t2 = norm(pts[:, :, 2:])
    return p1, p2, t1, t2


if __name__ == "__main__":
    key = jax.random.PRNGKey(0)
    B, N = 2, 200   # small shapes; deliberately not multiples of 8 / 128
    pts = jax.random.uniform(key, (B, N, 4), dtype=jnp.float32) * 100.0

    fwd = jax.jit(normalize_and_expand)
    pts1, pts2, T1, T2 = jax.block_until_ready(fwd(pts))

    r1, r2, rT1, rT2 = _reference(pts)
    assert pts1.shape == (B, 3, N) and pts2.shape == (B, 3, N)
    assert T1.shape == (B, 3, 3) and T2.shape == (B, 3, 3)
    assert jnp.allclose(pts1, r1, rtol=1e-4, atol=1e-4)
    assert jnp.allclose(pts2, r2, rtol=1e-4, atol=1e-4)
    assert jnp.allclose(T1, rT1, rtol=1e-4, atol=1e-4)
    assert jnp.allclose(T2, rT2, rtol=1e-4, atol=1e-4)

    print("KERNEL_OK")
</pallas_src>

<mosaic_0001>
module attributes {stable_mosaic.version = 11 : i64} {
  func.func @_norm_expand_kernel(%arg0: i32, %arg1: memref<4x8x200xf32, #tpu.memory_space<vmem>>, %arg2: memref<8x3x200xf32, #tpu.memory_space<vmem>>, %arg3: memref<8x3x200xf32, #tpu.memory_space<vmem>>, %arg4: memref<8x6xf32, #tpu.memory_space<vmem>>) attributes {dimension_semantics = [#tpu.dimension_semantics<parallel>], iteration_bounds = array<i64: 1>, scalar_prefetch = 0 : i64, scratch_operands = 0 : i64, tpu.core_type = #tpu.core_type<tc>, window_params = [{transform_indices = @transform_0, window_bounds = array<i64: 4, 8, 200>}, {transform_indices = @transform_1, window_bounds = array<i64: 8, 3, 200>}, {transform_indices = @transform_2, window_bounds = array<i64: 8, 3, 200>}, {transform_indices = @transform_3, window_bounds = array<i64: 8, 6>}]} {
    %c0 = arith.constant 0 : index
    %c0_0 = arith.constant 0 : index
    %c0_1 = arith.constant 0 : index
    %0 = vector.load %arg1[%c0, %c0_0, %c0_1] : memref<4x8x200xf32, #tpu.memory_space<vmem>>, vector<1x8x200xf32>
    %1 = vector.shape_cast %0 : vector<1x8x200xf32> to vector<8x200xf32>
    %c1 = arith.constant 1 : index
    %c0_2 = arith.constant 0 : index
    %c0_3 = arith.constant 0 : index
    %2 = vector.load %arg1[%c1, %c0_2, %c0_3] : memref<4x8x200xf32, #tpu.memory_space<vmem>>, vector<1x8x200xf32>
    %3 = vector.shape_cast %2 : vector<1x8x200xf32> to vector<8x200xf32>
    %c2 = arith.constant 2 : index
    %c0_4 = arith.constant 0 : index
    %c0_5 = arith.constant 0 : index
    %4 = vector.load %arg1[%c2, %c0_4, %c0_5] : memref<4x8x200xf32, #tpu.memory_space<vmem>>, vector<1x8x200xf32>
    %5 = vector.shape_cast %4 : vector<1x8x200xf32> to vector<8x200xf32>
    %c3 = arith.constant 3 : index
    %c0_6 = arith.constant 0 : index
    %c0_7 = arith.constant 0 : index
    %6 = vector.load %arg1[%c3, %c0_6, %c0_7] : memref<4x8x200xf32, #tpu.memory_space<vmem>>, vector<1x8x200xf32>
    %7 = vector.shape_cast %6 : vector<1x8x200xf32> to vector<8x200xf32>
    %cst = arith.constant dense<0.000000e+00> : vector<8xf32>
    %8 = vector.multi_reduction <add>, %1, %cst [1] : vector<8x200xf32> to vector<8xf32>
    %9 = vector.shape_cast %8 : vector<8xf32> to vector<8x1xf32>
    %cst_8 = arith.constant 5.000000e-03 : f32
    %10 = vector.broadcast %cst_8 : f32 to vector<8x1xf32>
    %11 = arith.mulf %9, %10 : vector<8x1xf32>
    %cst_9 = arith.constant dense<0.000000e+00> : vector<8xf32>
    %12 = vector.multi_reduction <add>, %3, %cst_9 [1] : vector<8x200xf32> to vector<8xf32>
    %13 = vector.shape_cast %12 : vector<8xf32> to vector<8x1xf32>
    %cst_10 = arith.constant 5.000000e-03 : f32
    %14 = vector.broadcast %cst_10 : f32 to vector<8x1xf32>
    %15 = arith.mulf %13, %14 : vector<8x1xf32>
    %16 = vector.broadcast %11 : vector<8x1xf32> to vector<8x200xf32>
    %17 = arith.subf %1, %16 : vector<8x200xf32>
    %18 = vector.broadcast %15 : vector<8x1xf32> to vector<8x200xf32>
    %19 = arith.subf %3, %18 : vector<8x200xf32>
    %20 = arith.mulf %17, %17 : vector<8x200xf32>
    %21 = arith.mulf %19, %19 : vector<8x200xf32>
    %22 = arith.addf %20, %21 : vector<8x200xf32>
    %23 = math.sqrt %22 : vector<8x200xf32>
    %cst_11 = arith.constant dense<0.000000e+00> : vector<8xf32>
    %24 = vector.multi_reduction <add>, %23, %cst_11 [1] : vector<8x200xf32> to vector<8xf32>
    %25 = vector.shape_cast %24 : vector<8xf32> to vector<8x1xf32>
    %cst_12 = arith.constant 5.000000e-03 : f32
    %26 = vector.broadcast %cst_12 : f32 to vector<8x1xf32>
    %27 = arith.mulf %25, %26 : vector<8x1xf32>
    %cst_13 = arith.constant 1.000000e+00 : f32
    %28 = vector.broadcast %cst_13 : f32 to vector<8x1xf32>
    %29 = arith.divf %28, %27 : vector<8x1xf32>
    %cst_14 = arith.constant 0.000000e+00 : f32
    %30 = vector.broadcast %cst_14 : f32 to vector<8x1xf32>
    %31 = arith.subf %30, %11 : vector<8x1xf32>
    %32 = arith.mulf %31, %29 : vector<8x1xf32>
    %cst_15 = arith.constant 0.000000e+00 : f32
    %33 = vector.broadcast %cst_15 : f32 to vector<8x1xf32>
    %34 = arith.subf %33, %15 : vector<8x1xf32>
    %35 = arith.mulf %34, %29 : vector<8x1xf32>
    %cst_16 = arith.constant dense<0.000000e+00> : vector<8xf32>
    %36 = vector.multi_reduction <add>, %5, %cst_16 [1] : vector<8x200xf32> to vector<8xf32>
    %37 = vector.shape_cast %36 : vector<8xf32> to vector<8x1xf32>
    %cst_17 = arith.constant 5.000000e-03 : f32
    %38 = vector.broadcast %cst_17 : f32 to vector<8x1xf32>
    %39 = arith.mulf %37, %38 : vector<8x1xf32>
    %cst_18 = arith.constant dense<0.000000e+00> : vector<8xf32>
    %40 = vector.multi_reduction <add>, %7, %cst_18 [1] : vector<8x200xf32> to vector<8xf32>
    %41 = vector.shape_cast %40 : vector<8xf32> to vector<8x1xf32>
    %cst_19 = arith.constant 5.000000e-03 : f32
    %42 = vector.broadcast %cst_19 : f32 to vector<8x1xf32>
    %43 = arith.mulf %41, %42 : vector<8x1xf32>
    %44 = vector.broadcast %39 : vector<8x1xf32> to vector<8x200xf32>
    %45 = arith.subf %5, %44 : vector<8x200xf32>
    %46 = vector.broadcast %43 : vector<8x1xf32> to vector<8x200xf32>
    %47 = arith.subf %7, %46 : vector<8x200xf32>
    %48 = arith.mulf %45, %45 : vector<8x200xf32>
    %49 = arith.mulf %47, %47 : vector<8x200xf32>
    %50 = arith.addf %48, %49 : vector<8x200xf32>
    %51 = math.sqrt %50 : vector<8x200xf32>
    %cst_20 = arith.constant dense<0.000000e+00> : vector<8xf32>
    %52 = vector.multi_reduction <add>, %51, %cst_20 [1] : vector<8x200xf32> to vector<8xf32>
    %53 = vector.shape_cast %52 : vector<8xf32> to vector<8x1xf32>
    %cst_21 = arith.constant 5.000000e-03 : f32
    %54 = vector.broadcast %cst_21 : f32 to vector<8x1xf32>
    %55 = arith.mulf %53, %54 : vector<8x1xf32>
    %cst_22 = arith.constant 1.000000e+00 : f32
    %56 = vector.broadcast %cst_22 : f32 to vector<8x1xf32>
    %57 = arith.divf %56, %55 : vector<8x1xf32>
    %cst_23 = arith.constant 0.000000e+00 : f32
    %58 = vector.broadcast %cst_23 : f32 to vector<8x1xf32>
    %59 = arith.subf %58, %39 : vector<8x1xf32>
    %60 = arith.mulf %59, %57 : vector<8x1xf32>
    %cst_24 = arith.constant 0.000000e+00 : f32
    %61 = vector.broadcast %cst_24 : f32 to vector<8x1xf32>
    %62 = arith.subf %61, %43 : vector<8x1xf32>
    %63 = arith.mulf %62, %57 : vector<8x1xf32>
    %cst_25 = arith.constant 1.000000e+00 : f32
    %64 = vector.broadcast %cst_25 : f32 to vector<8x200xf32>
    %65 = vector.broadcast %29 : vector<8x1xf32> to vector<8x200xf32>
    %66 = arith.mulf %65, %1 : vector<8x200xf32>
    %67 = vector.broadcast %32 : vector<8x1xf32> to vector<8x200xf32>
    %68 = arith.addf %66, %67 : vector<8x200xf32>
    %c0_26 = arith.constant 0 : index
    %c0_27 = arith.constant 0 : index
    %c0_28 = arith.constant 0 : index
    %69 = vector.load %arg2[%c0_26, %c0_27, %c0_28] : memref<8x3x200xf32, #tpu.memory_space<vmem>>, vector<8x1x200xf32>
    %70 = vector.shape_cast %69 : vector<8x1x200xf32> to vector<8x200xf32>
    %71 = vector.shape_cast %68 : vector<8x200xf32> to vector<8x1x200xf32>
    tpu.vector_store %arg2[%c0_26, %c0_27, %c0_28], %71 {strides = array<i32>} : memref<8x3x200xf32, #tpu.memory_space<vmem>>, vector<8x1x200xf32>,
    %72 = vector.broadcast %29 : vector<8x1xf32> to vector<8x200xf32>
    %73 = arith.mulf %72, %3 : vector<8x200xf32>
    %74 = vector.broadcast %35 : vector<8x1xf32> to vector<8x200xf32>
    %75 = arith.addf %73, %74 : vector<8x200xf32>
    %c0_29 = arith.constant 0 : index
    %c1_30 = arith.constant 1 : index
    %c0_31 = arith.constant 0 : index
    %76 = vector.load %arg2[%c0_29, %c1_30, %c0_31] : memref<8x3x200xf32, #tpu.memory_space<vmem>>, vector<8x1x200xf32>
    %77 = vector.shape_cast %76 : vector<8x1x200xf32> to vector<8x200xf32>
    %78 = vector.shape_cast %75 : vector<8x200xf32> to vector<8x1x200xf32>
    tpu.vector_store %arg2[%c0_29, %c1_30, %c0_31], %78 {strides = array<i32>} : memref<8x3x200xf32, #tpu.memory_space<vmem>>, vector<8x1x200xf32>,
    %c0_32 = arith.constant 0 : index
    %c2_33 = arith.constant 2 : index
    %c0_34 = arith.constant 0 : index
    %79 = vector.load %arg2[%c0_32, %c2_33, %c0_34] : memref<8x3x200xf32, #tpu.memory_space<vmem>>, vector<8x1x200xf32>
    %80 = vector.shape_cast %79 : vector<8x1x200xf32> to vector<8x200xf32>
    %81 = vector.shape_cast %64 : vector<8x200xf32> to vector<8x1x200xf32>
    tpu.vector_store %arg2[%c0_32, %c2_33, %c0_34], %81 {strides = array<i32>} : memref<8x3x200xf32, #tpu.memory_space<vmem>>, vector<8x1x200xf32>,
    %82 = vector.broadcast %57 : vector<8x1xf32> to vector<8x200xf32>
    %83 = arith.mulf %82, %5 : vector<8x200xf32>
    %84 = vector.broadcast %60 : vector<8x1xf32> to vector<8x200xf32>
    %85 = arith.addf %83, %84 : vector<8x200xf32>
    %c0_35 = arith.constant 0 : index
    %c0_36 = arith.constant 0 : index
    %c0_37 = arith.constant 0 : index
    %86 = vector.load %arg3[%c0_35, %c0_36, %c0_37] : memref<8x3x200xf32, #tpu.memory_space<vmem>>, vector<8x1x200xf32>
    %87 = vector.shape_cast %86 : vector<8x1x200xf32> to vector<8x200xf32>
    %88 = vector.shape_cast %85 : vector<8x200xf32> to vector<8x1x200xf32>
    tpu.vector_store %arg3[%c0_35, %c0_36, %c0_37], %88 {strides = array<i32>} : memref<8x3x200xf32, #tpu.memory_space<vmem>>, vector<8x1x200xf32>,
    %89 = vector.broadcast %57 : vector<8x1xf32> to vector<8x200xf32>
    %90 = arith.mulf %89, %7 : vector<8x200xf32>
    %91 = vector.broadcast %63 : vector<8x1xf32> to vector<8x200xf32>
    %92 = arith.addf %90, %91 : vector<8x200xf32>
    %c0_38 = arith.constant 0 : index
    %c1_39 = arith.constant 1 : index
    %c0_40 = arith.constant 0 : index
    %93 = vector.load %arg3[%c0_38, %c1_39, %c0_40] : memref<8x3x200xf32, #tpu.memory_space<vmem>>, vector<8x1x200xf32>
    %94 = vector.shape_cast %93 : vector<8x1x200xf32> to vector<8x200xf32>
    %95 = vector.shape_cast %92 : vector<8x200xf32> to vector<8x1x200xf32>
    tpu.vector_store %arg3[%c0_38, %c1_39, %c0_40], %95 {strides = array<i32>} : memref<8x3x200xf32, #tpu.memory_space<vmem>>, vector<8x1x200xf32>,
    %c0_41 = arith.constant 0 : index
    %c2_42 = arith.constant 2 : index
    %c0_43 = arith.constant 0 : index
    %96 = vector.load %arg3[%c0_41, %c2_42, %c0_43] : memref<8x3x200xf32, #tpu.memory_space<vmem>>, vector<8x1x200xf32>
    %97 = vector.shape_cast %96 : vector<8x1x200xf32> to vector<8x200xf32>
    %98 = vector.shape_cast %64 : vector<8x200xf32> to vector<8x1x200xf32>
    tpu.vector_store %arg3[%c0_41, %c2_42, %c0_43], %98 {strides = array<i32>} : memref<8x3x200xf32, #tpu.memory_space<vmem>>, vector<8x1x200xf32>,
    %c0_44 = arith.constant 0 : index
    %c0_45 = arith.constant 0 : index
    %99 = vector.load %arg4[%c0_44, %c0_45] : memref<8x6xf32, #tpu.memory_space<vmem>>, vector<8x1xf32>
    tpu.vector_store %arg4[%c0_44, %c0_45], %29 {strides = array<i32>} : memref<8x6xf32, #tpu.memory_space<vmem>>, vector<8x1xf32>,
    %c0_46 = arith.constant 0 : index
    %c1_47 = arith.constant 1 : index
    %100 = vector.load %arg4[%c0_46, %c1_47] : memref<8x6xf32, #tpu.memory_space<vmem>>, vector<8x1xf32>
    tpu.vector_store %arg4[%c0_46, %c1_47], %32 {strides = array<i32>} : memref<8x6xf32, #tpu.memory_space<vmem>>, vector<8x1xf32>,
    %c0_48 = arith.constant 0 : index
    %c2_49 = arith.constant 2 : index
    %101 = vector.load %arg4[%c0_48, %c2_49] : memref<8x6xf32, #tpu.memory_space<vmem>>, vector<8x1xf32>
    tpu.vector_store %arg4[%c0_48, %c2_49], %35 {strides = array<i32>} : memref<8x6xf32, #tpu.memory_space<vmem>>, vector<8x1xf32>,
    %c0_50 = arith.constant 0 : index
    %c3_51 = arith.constant 3 : index
    %102 = vector.load %arg4[%c0_50, %c3_51] : memref<8x6xf32, #tpu.memory_space<vmem>>, vector<8x1xf32>
    tpu.vector_store %arg4[%c0_50, %c3_51], %57 {strides = array<i32>} : memref<8x6xf32, #tpu.memory_space<vmem>>, vector<8x1xf32>,
    %c0_52 = arith.constant 0 : index
    %c4 = arith.constant 4 : index
    %103 = vector.load %arg4[%c0_52, %c4] : memref<8x6xf32, #tpu.memory_space<vmem>>, vector<8x1xf32>
    tpu.vector_store %arg4[%c0_52, %c4], %60 {strides = array<i32>} : memref<8x6xf32, #tpu.memory_space<vmem>>, vector<8x1xf32>,
    %c0_53 = arith.constant 0 : index
    %c5 = arith.constant 5 : index
    %104 = vector.load %arg4[%c0_53, %c5] : memref<8x6xf32, #tpu.memory_space<vmem>>, vector<8x1xf32>
    tpu.vector_store %arg4[%c0_53, %c5], %63 {strides = array<i32>} : memref<8x6xf32, #tpu.memory_space<vmem>>, vector<8x1xf32>,
    return
  }
  func.func @transform_0(%arg0: i32) -> (i32, i32, i32) {
    %c0_i32 = arith.constant 0 : i32
    %c0_i32_0 = arith.constant 0 : i32
    %c0_i32_1 = arith.constant 0 : i32
    return %c0_i32, %arg0, %c0_i32_0 : i32, i32, i32
  }
  func.func @transform_1(%arg0: i32) -> (i32, i32, i32) {
    %c0_i32 = arith.constant 0 : i32
    %c0_i32_0 = arith.constant 0 : i32
    %c0_i32_1 = arith.constant 0 : i32
    return %arg0, %c0_i32, %c0_i32_0 : i32, i32, i32
  }
  func.func @transform_2(%arg0: i32) -> (i32, i32, i32) {
    %c0_i32 = arith.constant 0 : i32
    %c0_i32_0 = arith.constant 0 : i32
    %c0_i32_1 = arith.constant 0 : i32
    return %arg0, %c0_i32, %c0_i32_0 : i32, i32, i32
  }
  func.func @transform_3(%arg0: i32) -> (i32, i32) {
    %c0_i32 = arith.constant 0 : i32
    %c0_i32_0 = arith.constant 0 : i32
    return %arg0, %c0_i32 : i32, i32
  }
}

</mosaic_0001>

<llo_original>
// kernel: normalize_and_expand.1
$region0: #{normalize_and_expand.1}
  #allocation0 [shape = 'u32[]', space=smem, size = 0x4, offset = 0x4, fixed_abs, tag = 'smem constant byte address 0x4 - core index']
  #allocation1 [shape = 'u32[144,128]{1,0:T(1,128)}', space=vmem, size = 0x12000, scoped, tag = 'internal scratch']
  %s0 = inlined_call_operand.vmem [shape: f32[4,8,200], index: 0, kind: input, shape index: {}]
  %s1 = inlined_call_operand.vmem [shape: f32[8,3,200], index: 1, kind: output, shape index: {0}]
  %s2 = inlined_call_operand.vmem [shape: f32[8,3,200], index: 2, kind: output, shape index: {1}]
  %s3 = inlined_call_operand.vmem [shape: f32[8,6], index: 3, kind: output, shape index: {2}]
  %4 = xla_tuple %s1, %s2, %s3
  %s5 = sld [smem:[#allocation0]]
  $region30: #{normalize_and_expand.1} parent=0
    _
  %s7 = ssub.s32 1, %s5
  %s8 = scalar_select 0, %s7, %s5
  // Predicated region
  $region2: #{normalize_and_expand.1} parent=0 // pred_check
    _
  $region3: #{normalize_and_expand.1} parent=0 // pred_check_branch
    %10 = sbr.rel (0) target = $region5
  $region4: #{normalize_and_expand.1} parent=0 // pred_region
    _
  $region5: #{normalize_and_expand.1} parent=0 // pred_fallthru
    _
  %v11 = vld [vmem:[%s0] sm:$0xff]
  %v12 = vld [vmem:[%s0 + $0x8] sm:$0xff]
  %s13 = scalar_lea.vmem %s0, 16
  %v14 = vld [vmem:[%s13] sm:$0xff]
  %v15 = vld [vmem:[%s13 + $0x8] sm:$0xff]
  %s16 = scalar_lea.vmem %s0, 32
  %v17 = vld [vmem:[%s16] sm:$0xff]
  %v18 = vld [vmem:[%s16 + $0x8] sm:$0xff]
  %s19 = scalar_lea.vmem %s0, 48
  %v20 = vld [vmem:[%s19] sm:$0xff]
  %v21 = vld [vmem:[%s19 + $0x8] sm:$0xff]
  %vm22 = vcmask 588800
  %v23 = vsel %vm22, %v12, 0.0
  %v24 = vadd.f32 %v11, %v23
  %25 = vadd.xlane.f32.xlu0 %v24
  %v26 = vpop.xlane.xlu0 %25
  %v27 = vmul.f32 %v26, 0.005
  %v28 = vsel %vm22, %v15, 0.0
  %v29 = vadd.f32 %v14, %v28
  %30 = vadd.xlane.f32.xlu0 %v29
  %v31 = vpop.xlane.xlu0 %30
  %v32 = vmul.f32 %v31, 0.005
  %v33 = vsub.f32 %v11, %v27
  %v34 = vsub.f32 %v12, %v27
  %v35 = vsub.f32 %v14, %v32
  %v36 = vsub.f32 %v15, %v32
  %v37 = vmul.f32 %v33, %v33
  %v38 = vmul.f32 %v34, %v34
  %v39 = vmul.f32 %v35, %v35
  %v40 = vmul.f32 %v36, %v36
  %v41 = vadd.f32 %v37, %v39
  %v42 = vadd.f32 %v38, %v40
  %v43 = vrsqrt.pop %v41
  %v44 = vmul.f32 %v41, %v43
  %vm45 = vcmp.eq.f32.partialorder %v41, inf
  %v46 = vsel %vm45, %v41, %v44
  %vm47 = vcmp.eq.f32.partialorder %v41, 0.0
  %v48 = vand.u32 %v41, 2147483648
  %v49 = vsel %vm47, %v48, %v46
  %v50 = vrsqrt.pop %v42
  %v51 = vmul.f32 %v42, %v50
  %vm52 = vcmp.eq.f32.partialorder %v42, inf
  %v53 = vsel %vm52, %v42, %v51
  %vm54 = vcmp.eq.f32.partialorder %v42, 0.0
  %v55 = vand.u32 %v42, 2147483648
  %v56 = vsel %vm54, %v55, %v53
  %v57 = vsel %vm22, %v56, 0.0
  %v58 = vadd.f32 %v49, %v57
  %59 = vadd.xlane.f32.xlu0 %v58
  %v60 = vpop.xlane.xlu0 %59
  %v61 = vmul.f32 %v60, 0.005
  %v62 = vrcp.pop %v61
  %v63 = vmul.f32 1.0, %v62
  %v64 = vsub.f32 0.0, %v27
  %v65 = vmul.f32 %v64, %v63
  %v66 = vsub.f32 0.0, %v32
  %v67 = vmul.f32 %v66, %v63
  %v68 = vsel %vm22, %v18, 0.0
  %v69 = vadd.f32 %v17, %v68
  %70 = vadd.xlane.f32.xlu0 %v69
  %v71 = vpop.xlane.xlu0 %70
  %v72 = vmul.f32 %v71, 0.005
  %v73 = vsel %vm22, %v21, 0.0
  %v74 = vadd.f32 %v20, %v73
  %75 = vadd.xlane.f32.xlu0 %v74
  %v76 = vpop.xlane.xlu0 %75
  %v77 = vmul.f32 %v76, 0.005
  %v78 = vsub.f32 %v17, %v72
  %v79 = vsub.f32 %v18, %v72
  %v80 = vsub.f32 %v20, %v77
  %v81 = vsub.f32 %v21, %v77
  %v82 = vmul.f32 %v78, %v78
  %v83 = vmul.f32 %v79, %v79
  %v84 = vmul.f32 %v80, %v80
  %v85 = vmul.f32 %v81, %v81
  %v86 = vadd.f32 %v82, %v84
  %v87 = vadd.f32 %v83, %v85
  %v88 = vrsqrt.pop %v86
  %v89 = vmul.f32 %v86, %v88
  %vm90 = vcmp.eq.f32.partialorder %v86, inf
  %v91 = vsel %vm90, %v86, %v89
  %vm92 = vcmp.eq.f32.partialorder %v86, 0.0
  %v93 = vand.u32 %v86, 2147483648
  %v94 = vsel %vm92, %v93, %v91
  %v95 = vrsqrt.pop %v87
  %v96 = vmul.f32 %v87, %v95
  %vm97 = vcmp.eq.f32.partialorder %v87, inf
  %v98 = vsel %vm97, %v87, %v96
  %vm99 = vcmp.eq.f32.partialorder %v87, 0.0
  %v100 = vand.u32 %v87, 2147483648
  %v101 = vsel %vm99, %v100, %v98
  %v102 = vsel %vm22, %v101, 0.0
  %v103 = vadd.f32 %v94, %v102
  %104 = vadd.xlane.f32.xlu0 %v103
  %v105 = vpop.xlane.xlu0 %104
  %v106 = vmul.f32 %v105, 0.005
  %v107 = vrcp.pop %v106
  %v108 = vmul.f32 1.0, %v107
  %v109 = vsub.f32 0.0, %v72
  %v110 = vmul.f32 %v109, %v108
  %v111 = vsub.f32 0.0, %v77
  %v112 = vmul.f32 %v111, %v108
  %v113 = vmul.f32 %v63, %v11
  %v114 = vmul.f32 %v63, %v12
  %v115 = vadd.f32 %v113, %v65
  %v116 = vadd.f32 %v114, %v65
  %v119 = vcombine.low %v115, %v116
  %v120 = vcombine.high %v115, %v116
  %v122 = vunpack.c.l.s4 1966171168
  %v123 = vunpack.c.0.s8 %v122
  %v124 = vlaneseq
  %v125 = vshrl.u32 %v124, 7
  %v126 = vsub.s32 %v123, %v125
  %v127 = vrot.slane %v119, %v126
  %v129 = vunpack.c.l.s4 1966171168
  %v130 = vunpack.c.0.s8 %v129
  %v131 = vlaneseq
  %v132 = vshrl.u32 %v131, 7
  %v133 = vsub.s32 %v130, %v132
  %v134 = vrot.slane %v120, %v133
  %v135 = vcombine.high %v127, %v127
  %v136 = vcombine.high %v134, %v134
  %v138 = vunpack.c.l.s4 1966171168
  %v139 = vunpack.c.0.s8 %v138
  %v140 = vlaneseq
  %v141 = vshrl.u32 %v140, 7
  %v142 = vsub.s32 %v139, %v141
  %v143 = vrot.slane %v127, %v142
  %v145 = vunpack.c.l.s4 1966171168
  %v146 = vunpack.c.0.s8 %v145
  %v147 = vlaneseq
  %v148 = vshrl.u32 %v147, 7
  %v149 = vsub.s32 %v146, %v148
  %v150 = vrot.slane %v134, %v149
  %v152 = vunpack.c.l.s4 1966171168
  %v153 = vunpack.c.0.s8 %v152
  %v154 = vlaneseq
  %v155 = vshrl.u32 %v154, 7
  %v156 = vsub.s32 %v153, %v155
  %v157 = vrot.slane %v135, %v156
  %v159 = vunpack.c.l.s4 1966171168
  %v160 = vunpack.c.0.s8 %v159
  %v161 = vlaneseq
  %v162 = vshrl.u32 %v161, 7
  %v163 = vsub.s32 %v160, %v162
  %v164 = vrot.slane %v136, %v163
  %v165 = vcombine.high %v143, %v143
  %v166 = vcombine.high %v150, %v150
  %v167 = vcombine.high %v157, %v157
  %v168 = vcombine.high %v164, %v164
  %v177 = vlaneseq
  %vm178 = vcmp.ge.s32.totalorder %v177, 0
  %vm179 = vcmp.lt.s32.totalorder %v177, 200
  %vm180 = vmand %vm178, %vm179
  %181 = vst.msk [vmem:[%s1] ss:$4 sm:$0x3] %vm180, %v143
  %s182 = scalar_lea.vmem %s1, 8
  %183 = vst.msk [vmem:[%s182] ss:$4 sm:$0x3] %vm180, %v157
  %s184 = scalar_lea.vmem %s1, 16
  %185 = vst.msk [vmem:[%s184] ss:$4 sm:$0x3] %vm180, %v165
  %s186 = scalar_lea.vmem %s1, 24
  %187 = vst.msk [vmem:[%s186] ss:$4 sm:$0x3] %vm180, %v167
  %s188 = scalar_lea.vmem %s1, 32
  %189 = vst.msk [vmem:[%s188] ss:$4 sm:$0x3] %vm180, %v150
  %s190 = scalar_lea.vmem %s1, 40
  %191 = vst.msk [vmem:[%s190] ss:$4 sm:$0x3] %vm180, %v164
  %s192 = scalar_lea.vmem %s1, 48
  %193 = vst.msk [vmem:[%s192] ss:$4 sm:$0x3] %vm180, %v166
  %s194 = scalar_lea.vmem %s1, 56
  %195 = vst.msk [vmem:[%s194] ss:$4 sm:$0x3] %vm180, %v168
  %v196 = vmul.f32 %v63, %v14
  %v197 = vmul.f32 %v63, %v15
  %v198 = vadd.f32 %v196, %v67
  %v199 = vadd.f32 %v197, %v67
  %v202 = vcombine.low %v198, %v199
  %v203 = vcombine.high %v198, %v199
  %v205 = vunpack.c.l.s4 1966171168
  %v206 = vunpack.c.0.s8 %v205
  %v207 = vlaneseq
  %v208 = vshrl.u32 %v207, 7
  %v209 = vsub.s32 %v206, %v208
  %v210 = vrot.slane %v202, %v209
  %v212 = vunpack.c.l.s4 1966171168
  %v213 = vunpack.c.0.s8 %v212
  %v214 = vlaneseq
  %v215 = vshrl.u32 %v214, 7
  %v216 = vsub.s32 %v213, %v215
  %v217 = vrot.slane %v203, %v216
  %v218 = vcombine.high %v210, %v210
  %v219 = vcombine.high %v217, %v217
  %v221 = vunpack.c.l.s4 1966171168
  %v222 = vunpack.c.0.s8 %v221
  %v223 = vlaneseq
  %v224 = vshrl.u32 %v223, 7
  %v225 = vsub.s32 %v222, %v224
  %v226 = vrot.slane %v210, %v225
  %v228 = vunpack.c.l.s4 1966171168
  %v229 = vunpack.c.0.s8 %v228
  %v230 = vlaneseq
  %v231 = vshrl.u32 %v230, 7
  %v232 = vsub.s32 %v229, %v231
  %v233 = vrot.slane %v217, %v232
  %v235 = vunpack.c.l.s4 1966171168
  %v236 = vunpack.c.0.s8 %v235
  %v237 = vlaneseq
  %v238 = vshrl.u32 %v237, 7
  %v239 = vsub.s32 %v236, %v238
  %v240 = vrot.slane %v218, %v239
  %v242 = vunpack.c.l.s4 1966171168
  %v243 = vunpack.c.0.s8 %v242
  %v244 = vlaneseq
  %v245 = vshrl.u32 %v244, 7
  %v246 = vsub.s32 %v243, %v245
  %v247 = vrot.slane %v219, %v246
  %v248 = vcombine.high %v226, %v226
  %v249 = vcombine.high %v233, %v233
  %v250 = vcombine.high %v240, %v240
  %v251 = vcombine.high %v247, %v247
  %s260 = scalar_lea.vmem %s1, 1
  %261 = vst.msk [vmem:[%s260] ss:$4 sm:$0x3] %vm180, %v226
  %s262 = scalar_lea.vmem %s1, 9
  %263 = vst.msk [vmem:[%s262] ss:$4 sm:$0x3] %vm180, %v240
  %s264 = scalar_lea.vmem %s1, 17
  %265 = vst.msk [vmem:[%s264] ss:$4 sm:$0x3] %vm180, %v248
  %s266 = scalar_lea.vmem %s1, 25
  %267 = vst.msk [vmem:[%s266] ss:$4 sm:$0x3] %vm180, %v250
  %s268 = scalar_lea.vmem %s1, 33
  %269 = vst.msk [vmem:[%s268] ss:$4 sm:$0x3] %vm180, %v233
  %s270 = scalar_lea.vmem %s1, 41
  %271 = vst.msk [vmem:[%s270] ss:$4 sm:$0x3] %vm180, %v247
  %s272 = scalar_lea.vmem %s1, 49
  %273 = vst.msk [vmem:[%s272] ss:$4 sm:$0x3] %vm180, %v249
  %s274 = scalar_lea.vmem %s1, 57
  %275 = vst.msk [vmem:[%s274] ss:$4 sm:$0x3] %vm180, %v251
  %s276 = scalar_lea.vmem %s1, 2
  %277 = vst.msk [vmem:[%s276] ss:$4 sm:$0x3] %vm180, 1.0
  %s278 = scalar_lea.vmem %s1, 10
  %279 = vst.msk [vmem:[%s278] ss:$4 sm:$0x3] %vm180, 1.0
  %s280 = scalar_lea.vmem %s1, 18
  %281 = vst.msk [vmem:[%s280] ss:$4 sm:$0x3] %vm180, 1.0
  %s282 = scalar_lea.vmem %s1, 26
  %283 = vst.msk [vmem:[%s282] ss:$4 sm:$0x3] %vm180, 1.0
  %s284 = scalar_lea.vmem %s1, 34
  %285 = vst.msk [vmem:[%s284] ss:$4 sm:$0x3] %vm180, 1.0
  %s286 = scalar_lea.vmem %s1, 42
  %287 = vst.msk [vmem:[%s286] ss:$4 sm:$0x3] %vm180, 1.0
  %s288 = scalar_lea.vmem %s1, 50
  %289 = vst.msk [vmem:[%s288] ss:$4 sm:$0x3] %vm180, 1.0
  %s290 = scalar_lea.vmem %s1, 58
  %291 = vst.msk [vmem:[%s290] ss:$4 sm:$0x3] %vm180, 1.0
  %v292 = vmul.f32 %v108, %v17
  %v293 = vmul.f32 %v108, %v18
  %v294 = vadd.f32 %v292, %v110
  %v295 = vadd.f32 %v293, %v110
  %v298 = vcombine.low %v294, %v295
  %v299 = vcombine.high %v294, %v295
  %v301 = vunpack.c.l.s4 1966171168
  %v302 = vunpack.c.0.s8 %v301
  %v303 = vlaneseq
  %v304 = vshrl.u32 %v303, 7
  %v305 = vsub.s32 %v302, %v304
  %v306 = vrot.slane %v298, %v305
  %v308 = vunpack.c.l.s4 1966171168
  %v309 = vunpack.c.0.s8 %v308
  %v310 = vlaneseq
  %v311 = vshrl.u32 %v310, 7
  %v312 = vsub.s32 %v309, %v311
  %v313 = vrot.slane %v299, %v312
  %v314 = vcombine.high %v306, %v306
  %v315 = vcombine.high %v313, %v313
  %v317 = vunpack.c.l.s4 1966171168
  %v318 = vunpack.c.0.s8 %v317
  %v319 = vlaneseq
  %v320 = vshrl.u32 %v319, 7
  %v321 = vsub.s32 %v318, %v320
  %v322 = vrot.slane %v306, %v321
  %v324 = vunpack.c.l.s4 1966171168
  %v325 = vunpack.c.0.s8 %v324
  %v326 = vlaneseq
  %v327 = vshrl.u32 %v326, 7
  %v328 = vsub.s32 %v325, %v327
  %v329 = vrot.slane %v313, %v328
  %v331 = vunpack.c.l.s4 1966171168
  %v332 = vunpack.c.0.s8 %v331
  %v333 = vlaneseq
  %v334 = vshrl.u32 %v333, 7
  %v335 = vsub.s32 %v332, %v334
  %v336 = vrot.slane %v314, %v335
  %v338 = vunpack.c.l.s4 1966171168
  %v339 = vunpack.c.0.s8 %v338
  %v340 = vlaneseq
  %v341 = vshrl.u32 %v340, 7
  %v342 = vsub.s32 %v339, %v341
  %v343 = vrot.slane %v315, %v342
  %v344 = vcombine.high %v322, %v322
  %v345 = vcombine.high %v329, %v329
  %v346 = vcombine.high %v336, %v336
  %v347 = vcombine.high %v343, %v343
  %356 = vst.msk [vmem:[%s2] ss:$4 sm:$0x3] %vm180, %v322
  %s357 = scalar_lea.vmem %s2, 8
  %358 = vst.msk [vmem:[%s357] ss:$4 sm:$0x3] %vm180, %v336
  %s359 = scalar_lea.vmem %s2, 16
  %360 = vst.msk [vmem:[%s359] ss:$4 sm:$0x3] %vm180, %v344
  %s361 = scalar_lea.vmem %s2, 24
  %362 = vst.msk [vmem:[%s361] ss:$4 sm:$0x3] %vm180, %v346
  %s363 = scalar_lea.vmem %s2, 32
  %364 = vst.msk [vmem:[%s363] ss:$4 sm:$0x3] %vm180, %v329
  %s365 = scalar_lea.vmem %s2, 40
  %366 = vst.msk [vmem:[%s365] ss:$4 sm:$0x3] %vm180, %v343
  %s367 = scalar_lea.vmem %s2, 48
  %368 = vst.msk [vmem:[%s367] ss:$4 sm:$0x3] %vm180, %v345
  %s369 = scalar_lea.vmem %s2, 56
  %370 = vst.msk [vmem:[%s369] ss:$4 sm:$0x3] %vm180, %v347
  %v371 = vmul.f32 %v108, %v20
  %v372 = vmul.f32 %v108, %v21
  %v373 = vadd.f32 %v371, %v112
  %v374 = vadd.f32 %v372, %v112
  %v377 = vcombine.low %v373, %v374
  %v378 = vcombine.high %v373, %v374
  %v380 = vunpack.c.l.s4 1966171168
  %v381 = vunpack.c.0.s8 %v380
  %v382 = vlaneseq
  %v383 = vshrl.u32 %v382, 7
  %v384 = vsub.s32 %v381, %v383
  %v385 = vrot.slane %v377, %v384
  %v387 = vunpack.c.l.s4 1966171168
  %v388 = vunpack.c.0.s8 %v387
  %v389 = vlaneseq
  %v390 = vshrl.u32 %v389, 7
  %v391 = vsub.s32 %v388, %v390
  %v392 = vrot.slane %v378, %v391
  %v393 = vcombine.high %v385, %v385
  %v394 = vcombine.high %v392, %v392
  %v396 = vunpack.c.l.s4 1966171168
  %v397 = vunpack.c.0.s8 %v396
  %v398 = vlaneseq
  %v399 = vshrl.u32 %v398, 7
  %v400 = vsub.s32 %v397, %v399
  %v401 = vrot.slane %v385, %v400
  %v403 = vunpack.c.l.s4 1966171168
  %v404 = vunpack.c.0.s8 %v403
  %v405 = vlaneseq
  %v406 = vshrl.u32 %v405, 7
  %v407 = vsub.s32 %v404, %v406
  %v408 = vrot.slane %v392, %v407
  %v410 = vunpack.c.l.s4 1966171168
  %v411 = vunpack.c.0.s8 %v410
  %v412 = vlaneseq
  %v413 = vshrl.u32 %v412, 7
  %v414 = vsub.s32 %v411, %v413
  %v415 = vrot.slane %v393, %v414
  %v417 = vunpack.c.l.s4 1966171168
  %v418 = vunpack.c.0.s8 %v417
  %v419 = vlaneseq
  %v420 = vshrl.u32 %v419, 7
  %v421 = vsub.s32 %v418, %v420
  %v422 = vrot.slane %v394, %v421
  %v423 = vcombine.high %v401, %v401
  %v424 = vcombine.high %v408, %v408
  %v425 = vcombine.high %v415, %v415
  %v426 = vcombine.high %v422, %v422
  %s435 = scalar_lea.vmem %s2, 1
  %436 = vst.msk [vmem:[%s435] ss:$4 sm:$0x3] %vm180, %v401
  %s437 = scalar_lea.vmem %s2, 9
  %438 = vst.msk [vmem:[%s437] ss:$4 sm:$0x3] %vm180, %v415
  %s439 = scalar_lea.vmem %s2, 17
  %440 = vst.msk [vmem:[%s439] ss:$4 sm:$0x3] %vm180, %v423
  %s441 = scalar_lea.vmem %s2, 25
  %442 = vst.msk [vmem:[%s441] ss:$4 sm:$0x3] %vm180, %v425
  %s443 = scalar_lea.vmem %s2, 33
  %444 = vst.msk [vmem:[%s443] ss:$4 sm:$0x3] %vm180, %v408
  %s445 = scalar_lea.vmem %s2, 41
  %446 = vst.msk [vmem:[%s445] ss:$4 sm:$0x3] %vm180, %v422
  %s447 = scalar_lea.vmem %s2, 49
  %448 = vst.msk [vmem:[%s447] ss:$4 sm:$0x3] %vm180, %v424
  %s449 = scalar_lea.vmem %s2, 57
  %450 = vst.msk [vmem:[%s449] ss:$4 sm:$0x3] %vm180, %v426
  %s451 = scalar_lea.vmem %s2, 2
  %452 = vst.msk [vmem:[%s451] ss:$4 sm:$0x3] %vm180, 1.0
  %s453 = scalar_lea.vmem %s2, 10
  %454 = vst.msk [vmem:[%s453] ss:$4 sm:$0x3] %vm180, 1.0
  %s455 = scalar_lea.vmem %s2, 18
  %456 = vst.msk [vmem:[%s455] ss:$4 sm:$0x3] %vm180, 1.0
  %s457 = scalar_lea.vmem %s2, 26
  %458 = vst.msk [vmem:[%s457] ss:$4 sm:$0x3] %vm180, 1.0
  %s459 = scalar_lea.vmem %s2, 34
  %460 = vst.msk [vmem:[%s459] ss:$4 sm:$0x3] %vm180, 1.0
  %s461 = scalar_lea.vmem %s2, 42
  %462 = vst.msk [vmem:[%s461] ss:$4 sm:$0x3] %vm180, 1.0
  %s463 = scalar_lea.vmem %s2, 50
  %464 = vst.msk [vmem:[%s463] ss:$4 sm:$0x3] %vm180, 1.0
  %s465 = scalar_lea.vmem %s2, 58
  %466 = vst.msk [vmem:[%s465] ss:$4 sm:$0x3] %vm180, 1.0
  %vm467 = vcmask 7168
  %468 = vst.msk [vmem:[%s3] sm:$0xff] %vm467, %v63
  %vm469 = vcmask 15368
  %470 = vst.msk [vmem:[%s3] sm:$0xff] %vm469, %v65
  %vm471 = vcmask 23568
  %472 = vst.msk [vmem:[%s3] sm:$0xff] %vm471, %v67
  %vm473 = vcmask 31768
  %474 = vst.msk [vmem:[%s3] sm:$0xff] %vm473, %v108
  %vm475 = vcmask 39968
  %476 = vst.msk [vmem:[%s3] sm:$0xff] %vm475, %v110
  %vm477 = vcmask 48168
  %478 = vst.msk [vmem:[%s3] sm:$0xff] %vm477, %v112
  // Predicated region
  $region6: #{normalize_and_expand.1} parent=0 // pred_check
    _
  $region7: #{normalize_and_expand.1} parent=0 // pred_check_branch
    %480 = sbr.rel (0) target = $region9
  $region8: #{normalize_and_expand.1} parent=0 // pred_region
    _
  $region9: #{normalize_and_expand.1} parent=0 // pred_fallthru
    _
  // Predicated region
  $region10: #{normalize_and_expand.1} parent=0 // pred_check
    _
  $region11: #{normalize_and_expand.1} parent=0 // pred_check_branch
    %482 = sbr.rel (0) target = $region13
  $region12: #{normalize_and_expand.1} parent=0 // pred_region
    _
  $region13: #{normalize_and_expand.1} parent=0 // pred_fallthru
    _
  // Predicated region
  $region14: #{normalize_and_expand.1} parent=0 // pred_check
    _
  $region15: #{normalize_and_expand.1} parent=0 // pred_check_branch
    %484 = sbr.rel (0) target = $region17
  $region16: #{normalize_and_expand.1} parent=0 // pred_region
    _
  $region17: #{normalize_and_expand.1} parent=0 // pred_fallthru
    _
  // Predicated region
  $region18: #{normalize_and_expand.1} parent=0 // pred_check
    _
  $region19: #{normalize_and_expand.1} parent=0 // pred_check_branch
    %486 = sbr.rel (0) target = $region21
  $region20: #{normalize_and_expand.1} parent=0 // pred_region
    _
  $region21: #{normalize_and_expand.1} parent=0 // pred_fallthru
    _
  // Predicated region
  $region22: #{normalize_and_expand.1} parent=0 // pred_check
    _
  $region23: #{normalize_and_expand.1} parent=0 // pred_check_branch
    %488 = sbr.rel (0) target = $region25
  $region24: #{normalize_and_expand.1} parent=0 // pred_region
    _
  $region25: #{normalize_and_expand.1} parent=0 // pred_fallthru
    _
  // Predicated region
  $region26: #{normalize_and_expand.1} parent=0 // pred_check
    _
  $region27: #{normalize_and_expand.1} parent=0 // pred_check_branch
    %490 = sbr.rel (0) target = $region29
  $region28: #{normalize_and_expand.1} parent=0 // pred_region
    _
  $region29: #{normalize_and_expand.1} parent=0 // pred_fallthru
    _

</llo_original>
